<compile_context>
chip_gen: v5e
topology: v5e:2x2
jax: 0.10.0
libtpu: 0.0.40
codegen_flags: <defaults>
</compile_context>

<pallas_src>
import math

import jax
import jax.numpy as jnp
from jax.experimental import pallas as pl
from jax.experimental.pallas import tpu as pltpu


def embed_pe_kernel(ids_ref, table_ref, pe_ref, out_ref, rows_ref, sem):
    """Gather TM embedding rows via DMA from HBM, add per-tile PE, store lane-dense tile.

    ids_ref:   SMEM (N,)  int32 token ids (scalar prefetch), s-major flatten of (S, B)
    table_ref: HBM  (V, D) float32 embedding table (row 0 == 0 for padding_idx=0)
    pe_ref:    VMEM (TM, D) positional-encoding rows for this token tile
    out_ref:   VMEM (TM, D) output tile
    rows_ref:  VMEM (TM, D) scratch for gathered embedding rows
    sem:       DMA semaphore shared by the TM row copies
    """
    tm, _ = out_ref.shape
    base = pl.program_id(0) * tm

    def row_copy(r, tok):
        # (1, D) row copy: HBM table row `tok` -> scratch row `r`.
        return pltpu.make_async_copy(
            table_ref.at[pl.ds(tok, 1), :],
            rows_ref.at[pl.ds(r, 1), :],
            sem,
        )

    # Issue all TM row gathers, then drain them (same descriptors -> matched waits).
    @pl.loop(0, tm)
    def _issue(r):
        row_copy(r, ids_ref[base + r]).start()

    @pl.loop(0, tm)
    def _drain(r):
        row_copy(r, ids_ref[base + r]).wait()

    # Lane-dense VPU add + store (D multiple of 128 -> unmasked vst).
    out_ref[...] = (rows_ref[...] + pe_ref[...]).astype(out_ref.dtype)


def make_positional_encoding(max_len, d_model, dtype=jnp.float32):
    """Reproduces the PyTorch PositionalEncoding buffer pe[:, 0, :]."""
    position = jnp.arange(max_len, dtype=jnp.float32)[:, None]            # (L, 1)
    div_term = jnp.exp(jnp.arange(0, d_model, 2, dtype=jnp.float32)
                       * (-math.log(10000.0) / d_model))                  # (D/2,)
    ang = position * div_term                                             # (L, D/2)
    pe = jnp.stack([jnp.sin(ang), jnp.cos(ang)], axis=-1)                 # (L, D/2, 2)
    return pe.reshape(max_len, d_model).astype(dtype)


def init_embedding(key, vocab_size, d_model, dtype=jnp.float32):
    """nn.Embedding init: N(0,1), with padding_idx=0 row zeroed."""
    table = jax.random.normal(key, (vocab_size, d_model), dtype=dtype)
    return table.at[0].set(0.0)


def _pick_token_tile(n_tokens, target=256):
    """Largest multiple-of-8 divisor of n_tokens not exceeding `target` (fallback: n)."""
    best = None
    for tm in range(8, min(n_tokens, target) + 1, 8):
        if n_tokens % tm == 0:
            best = tm
    return best if best is not None else n_tokens


def transformer_embedding(ids, embed_table, pe_full):
    """ids: (S, B) int32 -> (S, B, D) float32 (embedding lookup + positional encoding)."""
    S, B = ids.shape
    V, D = embed_table.shape
    assert D % 128 == 0, "d_model must be a multiple of 128 for lane-dense tiles"

    N = S * B
    tm = _pick_token_tile(N)
    assert N % tm == 0

    # Glue (plain JAX): flatten tokens s-major, replicate PE across batch so the
    # per-tile PE block is a simple contiguous (TM, D) slab (row t == pe[t // B]).
    ids_flat = ids.reshape(N).astype(jnp.int32)
    pe_rep = jnp.repeat(pe_full[:S], B, axis=0)                            # (N, D)

    grid_spec = pltpu.PrefetchScalarGridSpec(
        num_scalar_prefetch=1,                 # ids -> SMEM, available to index_maps/kernel
        grid=(N // tm,),
        in_specs=[
            pl.BlockSpec(memory_space=pl.ANY),                    # table stays in HBM
            pl.BlockSpec((tm, D), lambda i, ids: (i, 0)),         # PE tile (pipelined)
        ],
        out_specs=pl.BlockSpec((tm, D), lambda i, ids: (i, 0)),   # lane-dense output tile
        scratch_shapes=[
            pltpu.VMEM((tm, D), embed_table.dtype),               # gathered rows
            pltpu.SemaphoreType.DMA(()),                          # shared row-copy sem
        ],
    )

    out_flat = pl.pallas_call(
        embed_pe_kernel,
        out_shape=jax.ShapeDtypeStruct((N, D), jnp.float32),
        grid_spec=grid_spec,
        compiler_params=pltpu.CompilerParams(
            dimension_semantics=("parallel",)),                   # megacore on v7x
    )(ids_flat, embed_table, pe_rep)

    return out_flat.reshape(S, B, D)


def reference(ids, embed_table, pe_full):
    """Pure-JAX reference of the PyTorch forward (dropout in eval mode)."""
    emb = jnp.take(embed_table, ids, axis=0)                      # (S, B, D)
    return emb + pe_full[: ids.shape[0]][:, None, :]


if __name__ == "__main__":
    vocab_size = 1024
    d_model = 128
    seq_len = 128
    batch = 4
    max_len = 256   # small stand-in for max_len=5000

    key = jax.random.PRNGKey(0)
    k_emb, k_ids = jax.random.split(key)

    embed_table = init_embedding(k_emb, vocab_size, d_model)
    pe_full = make_positional_encoding(max_len, d_model)
    ids = jax.random.randint(k_ids, (seq_len, batch), 0, vocab_size, dtype=jnp.int32)

    out = jax.block_until_ready(transformer_embedding(ids, embed_table, pe_full))

    ref = reference(ids, embed_table, pe_full)
    assert out.shape == (seq_len, batch, d_model)
    assert jnp.allclose(out, ref, atol=1e-5, rtol=1e-5), "mismatch vs reference"

    print("KERNEL_OK")
</pallas_src>

<mosaic_0001>
module attributes {stable_mosaic.version = 11 : i64} {
  func.func @embed_pe_kernel(%arg0: i32, %arg1: memref<512xi32, #tpu.memory_space<smem>>, %arg2: memref<1024x128xf32, #tpu.memory_space<any>>, %arg3: memref<256x128xf32, #tpu.memory_space<vmem>>, %arg4: memref<256x128xf32, #tpu.memory_space<vmem>>, %arg5: memref<256x128xf32, #tpu.memory_space<vmem>>, %arg6: memref<!tpu.dma_semaphore, #tpu.memory_space<semaphore_mem>>) attributes {dimension_semantics = [#tpu.dimension_semantics<parallel>], iteration_bounds = array<i64: 2>, scalar_prefetch = 1 : i64, scratch_operands = 2 : i64, tpu.core_type = #tpu.core_type<tc>, window_params = [{}, {transform_indices = @transform_1, window_bounds = array<i64: 256, 128>}, {transform_indices = @transform_2, window_bounds = array<i64: 256, 128>}]} {
    %c256_i32 = arith.constant 256 : i32
    %0 = arith.muli %arg0, %c256_i32 : i32
    %c0_i32 = arith.constant 0 : i32
    %c256_i32_0 = arith.constant 256 : i32
    %1 = arith.addi %c0_i32, %c256_i32_0 : i32
    %c1_i32 = arith.constant 1 : i32
    scf.for %arg7 = %c0_i32 to %1 step %c1_i32  : i32 {
      %c1_i32_11 = arith.constant 1 : i32
      %7 = arith.muli %arg7, %c1_i32_11 : i32
      %c0_i32_12 = arith.constant 0 : i32
      %8 = arith.addi %c0_i32_12, %7 : i32
      %9 = arith.addi %0, %8 : i32
      %10 = arith.index_cast %9 : i32 to index
      %11 = memref.load %arg1[%10] : memref<512xi32, #tpu.memory_space<smem>>
      %c0_i32_13 = arith.constant 0 : i32
      %12 = tpu.memref_slice %arg2[%11, %c0_i32_13] : memref<1024x128xf32, #tpu.memory_space<any>> -> memref<1x128xf32, #tpu.memory_space<any>>
      %c0_i32_14 = arith.constant 0 : i32
      %13 = tpu.memref_slice %arg5[%8, %c0_i32_14] : memref<256x128xf32, #tpu.memory_space<vmem>> -> memref<1x128xf32, #tpu.memory_space<vmem>>
      tpu.enqueue_dma source(%12 : memref<1x128xf32, #tpu.memory_space<any>>) target(%13 : memref<1x128xf32, #tpu.memory_space<vmem>>) target_semaphore(%arg6 : memref<!tpu.dma_semaphore, #tpu.memory_space<semaphore_mem>>)
    }
    %c256_i32_1 = arith.constant 256 : i32
    %c0_i32_2 = arith.constant 0 : i32
    %c256_i32_3 = arith.constant 256 : i32
    %2 = arith.addi %c0_i32_2, %c256_i32_3 : i32
    %c1_i32_4 = arith.constant 1 : i32
    scf.for %arg7 = %c0_i32_2 to %2 step %c1_i32_4  : i32 {
      %c1_i32_11 = arith.constant 1 : i32
      %7 = arith.muli %arg7, %c1_i32_11 : i32
      %c0_i32_12 = arith.constant 0 : i32
      %8 = arith.addi %c0_i32_12, %7 : i32
      %9 = arith.addi %0, %8 : i32
      %10 = arith.index_cast %9 : i32 to index
      %11 = memref.load %arg1[%10] : memref<512xi32, #tpu.memory_space<smem>>
      %c0_i32_13 = arith.constant 0 : i32
      %12 = tpu.memref_slice %arg2[%11, %c0_i32_13] : memref<1024x128xf32, #tpu.memory_space<any>> -> memref<1x128xf32, #tpu.memory_space<any>>
      %c0_i32_14 = arith.constant 0 : i32
      %13 = tpu.memref_slice %arg5[%8, %c0_i32_14] : memref<256x128xf32, #tpu.memory_space<vmem>> -> memref<1x128xf32, #tpu.memory_space<vmem>>
      tpu.wait_dma2 semaphore(%arg6 : memref<!tpu.dma_semaphore, #tpu.memory_space<semaphore_mem>>) src(%12 : memref<1x128xf32, #tpu.memory_space<any>>) dst(%13 : memref<1x128xf32, #tpu.memory_space<vmem>>)
    }
    %c256_i32_5 = arith.constant 256 : i32
    %c0 = arith.constant 0 : index
    %c0_6 = arith.constant 0 : index
    %3 = vector.load %arg5[%c0, %c0_6] : memref<256x128xf32, #tpu.memory_space<vmem>>, vector<256x128xf32>
    %c0_7 = arith.constant 0 : index
    %c0_8 = arith.constant 0 : index
    %4 = vector.load %arg3[%c0_7, %c0_8] : memref<256x128xf32, #tpu.memory_space<vmem>>, vector<256x128xf32>
    %5 = arith.addf %3, %4 : vector<256x128xf32>
    %c0_9 = arith.constant 0 : index
    %c0_10 = arith.constant 0 : index
    %6 = vector.load %arg4[%c0_9, %c0_10] : memref<256x128xf32, #tpu.memory_space<vmem>>, vector<256x128xf32>
    tpu.vector_store %arg4[%c0_9, %c0_10], %5 {strides = array<i32>} : memref<256x128xf32, #tpu.memory_space<vmem>>, vector<256x128xf32>,
    return
  }
  func.func @transform_1(%arg0: i32, %arg1: memref<512xi32, #tpu.memory_space<smem>>) -> (i32, i32) {
    %c0_i32 = arith.constant 0 : i32
    %c0_i32_0 = arith.constant 0 : i32
    return %arg0, %c0_i32 : i32, i32
  }
  func.func @transform_2(%arg0: i32, %arg1: memref<512xi32, #tpu.memory_space<smem>>) -> (i32, i32) {
    %c0_i32 = arith.constant 0 : i32
    %c0_i32_0 = arith.constant 0 : i32
    return %arg0, %c0_i32 : i32, i32
  }
}

</mosaic_0001>

<llo_original>
// kernel: tpu_custom_call.1
$region0: #{tpu_custom_call.1}
  #allocation0 [shape = 'u32[]', space=smem, size = 0x4, offset = 0x4, fixed_abs, tag = 'smem constant byte address 0x4 - core index']
  #allocation1 [shape = 'u32[72,128]{1,0:T(1,128)}', space=vmem, size = 0x9000, scoped, tag = 'internal scratch']
  #allocation2 [shape = 'f32[256,128]{1,0:T(8,128)}', space=vmem, size = 0x20000, scoped, tag = 'scratch operand']
  #allocation3 [shape = 's32[1]{0}', space=sflag, size = 0x4, scoped, tag = 'scratch operand']
  #allocation4 [shape = 's32[1]{0}', space=sflag, size = 0x4, scoped, tag = 'scoped memory for tpu_custom_call.1']
  #allocation5 [shape = 'u8[2048]{0}', space=smem, size = 0x800, scoped, tag = 'prefetched SMEM operand 0']
  #allocation10 [shape = 's32[]', space=sflag, size = 0x4, offset = 0, fixed_abs, tag = 'sflag constant byte address 0x0 - dummy sync flag']
  #allocation11 [shape = 's32[]', space=sflag, size = 0x4, offset = 0, fixed_abs, tag = 'sflag constant byte address 0x0 - dummy sync flag']
  #allocation12 [shape = 'u32[]', space=smem, size = 0x4, offset = 0x44, fixed_abs, tag = 'smem constant byte address 0x44 - assertion arg 0']
  #allocation13 [shape = 'u32[]', space=smem, size = 0x4, offset = 0x48, fixed_abs, tag = 'smem constant byte address 0x48 - assertion arg 1']
  %s0 = inlined_call_operand.hbm [shape: s32[512], index: 0, kind: input, shape index: {}]
  %s1 = inlined_call_operand.hbm [shape: f32[1024,128], index: 1, kind: input, shape index: {}]
  %s2 = inlined_call_operand.hbm [shape: f32[512,128], index: 2, kind: input, shape index: {}]
  %s3 = inlined_call_operand.hbm [shape: f32[512,128], index: 3, kind: output, shape index: {}]
  %s4 = sld [smem:[#allocation0]]
  $region59: #{tpu_custom_call.1} parent=0
    _
  %s6 = ssub.s32 1, %s4
  %s7 = scalar_select 0, %s6, %s4
  %s9 = sshll.u32 %s0, 4
  %s10 = int_to_ptr.hbm [resolvable:$true] %s9
  %12 = dma.hbm_to_smem %s10, 64, [#allocation5], [#allocation4]
  %14 = dma.done [#allocation4], 64
  %15 = sfence
  $region1: #{tpu_custom_call.1} parent=0
    #allocation6 [shape = 'u8[262144]{0}', space=vmem, size = 0x40000, scoped, tag = 'input window, operand 2']
    #allocation7 [shape = 's32[2]{0}', space=sflag, size = 0x8, scoped, tag = 'scoped memory for tpu_custom_call.1']
    #allocation8 [shape = 's32[2]{0}', space=sflag, size = 0x8, scoped, tag = 'scoped memory for tpu_custom_call.1']
    #allocation9 [shape = 'u8[262144]{0}', space=vmem, size = 0x40000, scoped, tag = 'output window, operand 0']
    %16 = vsyncpa [#allocation7], 0
    %s17 = scalar_lea.sflag [#allocation7], 1
    %18 = vsyncpa %s17, 0
    %19 = vsyncpa [#allocation8], 0
    %s20 = scalar_lea.sflag [#allocation8], 1
    %21 = vsyncpa %s20, 0
    loop: start=0, step=1, limit=4
    $region2: #{tpu_custom_call.1} parent=1 // loop_pre_header
      _
    $region3: #{tpu_custom_call.1} parent=1 // loop_header
      %s23 = sphi 0, %s27
      %p24 = scmp.ge.s32.totalorder %s23, 4
      %s33 = sphi 0, %s35
      %s36 = sphi 0, %s33
      %s37 = sphi 0, %s36
      %s53 = sphi 0, %s37
      %s59 = sphi 0, %s61
      %s62 = sphi 0, %s59
      %s63 = sphi 0, %s62
      %s79 = sphi 0, %s63
    $region4: #{tpu_custom_call.1} parent=1 // loop_header_branch
      %26 = sbr.rel (%p24) target = $region8
    $region5: #{tpu_custom_call.1} parent=1 // loop_body
      %s28 = ssub.s32 %s23, 1
      %s29 = ssub.s32 %s23, 2
      %s30 = sadd.s32 %s23, 1
      %s31 = ssub.s32 %s23, %s30
      %p32 = scmp.eq.s32.totalorder %s31, 0
      %s34 = sadd.s32 %s33, 1
      %s35 = scalar_select %p32, %s33, %s34
      %p38 = pneg %p32
      %p39 = scmp.eq.s32.totalorder %s23, 1
      %p40 = por %p38, %p39
      %p41 = scmp.ne.s32.totalorder %s33, %s36
      %p42 = scmp.eq.s32.totalorder %s23, 0
      %p43 = por %p41, %p42
      %p44 = scmp.ne.s32.totalorder %s33, %s36
      %p45 = scmp.eq.s32.totalorder %s28, 1
      %p46 = por %p44, %p45
      %p47 = scmp.ne.s32.totalorder %s36, %s37
      %p48 = scmp.eq.s32.totalorder %s28, 0
      %p49 = por %p47, %p48
      %p50 = scmp.ne.s32.totalorder %s36, %s37
      %p51 = scmp.eq.s32.totalorder %s29, 1
      %p52 = por %p50, %p51
      %p54 = scmp.ne.s32.totalorder %s37, %s53
      %p55 = scmp.eq.s32.totalorder %s29, 0
      %p56 = por %p54, %p55
      %s57 = ssub.s32 %s23, %s30
      %p58 = scmp.eq.s32.totalorder %s57, 0
      %s60 = sadd.s32 %s59, 1
      %s61 = scalar_select %p58, %s59, %s60
      %p64 = pneg %p58
      %p65 = scmp.eq.s32.totalorder %s23, 1
      %p66 = por %p64, %p65
      %p67 = scmp.ne.s32.totalorder %s59, %s62
      %p68 = scmp.eq.s32.totalorder %s23, 0
      %p69 = por %p67, %p68
      %p70 = scmp.ne.s32.totalorder %s59, %s62
      %p71 = scmp.eq.s32.totalorder %s28, 1
      %p72 = por %p70, %p71
      %p73 = scmp.ne.s32.totalorder %s62, %s63
      %p74 = scmp.eq.s32.totalorder %s28, 0
      %p75 = por %p73, %p74
      %p76 = scmp.ne.s32.totalorder %s62, %s63
      %p77 = scmp.eq.s32.totalorder %s29, 1
      %p78 = por %p76, %p77
      %p80 = scmp.ne.s32.totalorder %s63, %s79
      %p81 = scmp.eq.s32.totalorder %s29, 0
      %p82 = por %p80, %p81
      %p83 = scmp.le.s32.totalorder 1, %s23
      %p84 = scmp.lt.s32.totalorder %s23, 3
      %p85 = pnand %p83, %p84
      %p86 = pneg %p85
      // Predicated region
      $region9: #{tpu_custom_call.1} parent=5 // pred_check
        _
      $region10: #{tpu_custom_call.1} parent=5 // pred_check_branch
        %88 = sbr.rel (%p85) target = $region12
      $region11: #{tpu_custom_call.1} parent=5 // pred_region
        %s89 = ssub.s32 %s23, 1
      $region12: #{tpu_custom_call.1} parent=5 // pred_fallthru
        _
      %p90 = scmp.lt.s32.totalorder %s23, 2
      // Predicated region
      $region13: #{tpu_custom_call.1} parent=5 // pred_check
        %p91 = pneg %p90
      $region14: #{tpu_custom_call.1} parent=5 // pred_check_branch
        %93 = sbr.rel (%p91) target = $region16
      $region15: #{tpu_custom_call.1} parent=5 // pred_region
        // Predicated region
        $region17: #{tpu_custom_call.1} parent=15 // pred_check
          %p94 = pneg %p43
        $region18: #{tpu_custom_call.1} parent=15 // pred_check_branch
          %96 = sbr.rel (%p94) target = $region20
        $region19: #{tpu_custom_call.1} parent=15 // pred_region
          %s97 = sand.u32 %s33, 1
          %s98 = scalar_lea.sflag [#allocation7], %s97
          %s99 = sand.u32 %s33, 1
          %s100 = smul.addr %s99, 256
          %s101 = scalar_lea.vmem [#allocation6], %s100
          %s102 = smul.u32 32, %s23
          %104 = vsyncadd %s98, 0
          %s105 = smul.addr %s102, 8
          %s106 = scalar_lea.hbm %s2, %s105
          %s107 = sshll.u32 %s106, 4
          %s108 = int_to_ptr.hbm [resolvable:$true] %s107
          %s109 = sshll.u32 %s101, 4
          %s110 = int_to_ptr.vmem [resolvable:$true] %s109
          %115 = dma.hbm_to_vmem [thread:$0]  %s108, 4096, %s110, %s98, 128, 128, 8
        $region20: #{tpu_custom_call.1} parent=15 // pred_fallthru
          _
      $region16: #{tpu_custom_call.1} parent=5 // pred_fallthru
        _
      %p116 = scmp.le.s32.totalorder 1, %s23
      %p117 = scmp.lt.s32.totalorder %s23, 3
      %p118 = pnand %p116, %p117
      %p119 = pneg %p118
      // Predicated region
      $region21: #{tpu_custom_call.1} parent=5 // pred_check
        _
      $region22: #{tpu_custom_call.1} parent=5 // pred_check_branch
        %121 = sbr.rel (%p118) target = $region24
      $region23: #{tpu_custom_call.1} parent=5 // pred_region
        %s122 = ssub.s32 %s23, 1
        %s123 = sand.u32 %s36, 1
        %s124 = scalar_lea.sflag [#allocation7], %s123
        %s125 = sand.u32 %s36, 1
        %s126 = smul.addr %s125, 256
        %s127 = scalar_lea.vmem [#allocation6], %s126
        // Predicated region
        $region25: #{tpu_custom_call.1} parent=23 // pred_check
          %p128 = pneg %p49
        $region26: #{tpu_custom_call.1} parent=23 // pred_check_branch
          %130 = sbr.rel (%p128) target = $region28
        $region27: #{tpu_custom_call.1} parent=23 // pred_region
          %132 = dma.done %s124, 4096
        $region28: #{tpu_custom_call.1} parent=23 // pred_fallthru
          _
        %s133 = sand.u32 %s36, 1
        %s134 = scalar_lea.sflag [#allocation7], %s133
        %s135 = sand.u32 %s36, 1
        %s136 = smul.addr %s135, 256
        %s137 = scalar_lea.vmem [#allocation6], %s136
        %p138 = pneg %p49
        %p139 = pneg %p46
        %p140 = pneg %p75
        %p141 = pneg %p72
        %s142 = sand.u32 %s62, 1
        %s143 = scalar_lea.sflag [#allocation8], %s142
        %s144 = sand.u32 %s62, 1
        %s145 = smul.addr %s144, 256
        %s146 = scalar_lea.vmem [#allocation9], %s145
        %s147 = smul.u32 32, %s28
        %s148 = smul.u32 32, %s28
        %s149 = smul.u32 %s28, 256
        loop: start=0, step=1, limit=256
        $region29: #{tpu_custom_call.1} parent=23 // loop_pre_header
          _
        $region30: #{tpu_custom_call.1} parent=23 // loop_header
          %s151 = sphi 0, %s155
          %p152 = scmp.ge.s32.totalorder %s151, 256
        $region31: #{tpu_custom_call.1} parent=23 // loop_header_branch
          %154 = sbr.rel (%p152) target = $region35
        $region32: #{tpu_custom_call.1} parent=23 // loop_body
          %s156 = sadd.s32 %s149, %s151
          %s157 = sld [smem:[#allocation5 + %s156]]
          %s158 = scalar_lea.hbm %s1, %s157
          %s159 = scalar_lea.vmem [#allocation2], %s151
          // Predicated region
          $region36: #{tpu_custom_call.1} parent=32 // pred_check
            _
          $region37: #{tpu_custom_call.1} parent=32 // pred_check_branch
            %161 = sbr.rel target = $region39
          $region38: #{tpu_custom_call.1} parent=32 // pred_region
            %162 = sst [smem:[#allocation12]] [#allocation11]
            %163 = sst [smem:[#allocation13]] [#allocation10]
          $region39: #{tpu_custom_call.1} parent=32 // pred_fallthru
            _
          %165 = shalt.err (0)
          %s167 = sshll.u32 %s158, 4
          %s168 = int_to_ptr.hbm [resolvable:$true] %s167
          %s169 = sshll.u32 %s159, 4
          %s170 = int_to_ptr.vmem [resolvable:$true] %s169
          %172 = dma.hbm_to_vmem [thread:$0]  %s168, 16, %s170, [#allocation3]
        $region33: #{tpu_custom_call.1} parent=23 // loop_footer
          %s155 = sadd.s32 1, %s151
        $region34: #{tpu_custom_call.1} parent=23 // loop_footer_branch
          %150 = sbr.rel target = $region30
        $region35: #{tpu_custom_call.1} parent=23 // loop_exit
          _
        loop: start=0, step=1, limit=256
        $region40: #{tpu_custom_call.1} parent=23 // loop_pre_header
          _
        $region41: #{tpu_custom_call.1} parent=23 // loop_header
          %s174 = sphi 0, %s178
          %p175 = scmp.ge.s32.totalorder %s174, 256
        $region42: #{tpu_custom_call.1} parent=23 // loop_header_branch
          %177 = sbr.rel (%p175) target = $region46
        $region43: #{tpu_custom_call.1} parent=23 // loop_body
          %s179 = sadd.s32 %s149, %s174
          %s180 = sld [smem:[#allocation5 + %s179]]
          %s181 = smul.u32 1, 1
          %s182 = sshll.u32 %s181, 4
          %183 = dma.done [#allocation3], %s182
        $region44: #{tpu_custom_call.1} parent=23 // loop_footer
          %s178 = sadd.s32 1, %s174
        $region45: #{tpu_custom_call.1} parent=23 // loop_footer_branch
          %173 = sbr.rel target = $region41
        $region46: #{tpu_custom_call.1} parent=23 // loop_exit
          _
        %v184 = vld [vmem:[#allocation2] sm:$0xff]
        %v185 = vld [vmem:[#allocation2 + $0x8] sm:$0xff]
        %v186 = vld [vmem:[#allocation2 + $0x10] sm:$0xff]
        %v187 = vld [vmem:[#allocation2 + $0x18] sm:$0xff]
        %v188 = vld [vmem:[#allocation2 + $0x20] sm:$0xff]
        %v189 = vld [vmem:[#allocation2 + $0x28] sm:$0xff]
        %v190 = vld [vmem:[#allocation2 + $0x30] sm:$0xff]
        %v191 = vld [vmem:[#allocation2 + $0x38] sm:$0xff]
        %v192 = vld [vmem:[#allocation2 + $0x40] sm:$0xff]
        %v193 = vld [vmem:[#allocation2 + $0x48] sm:$0xff]
        %v194 = vld [vmem:[#allocation2 + $0x50] sm:$0xff]
        %v195 = vld [vmem:[#allocation2 + $0x58] sm:$0xff]
        %v196 = vld [vmem:[#allocation2 + $0x60] sm:$0xff]
        %v197 = vld [vmem:[#allocation2 + $0x68] sm:$0xff]
        %v198 = vld [vmem:[#allocation2 + $0x70] sm:$0xff]
        %v199 = vld [vmem:[#allocation2 + $0x78] sm:$0xff]
        %v200 = vld [vmem:[#allocation2 + $0x80] sm:$0xff]
        %v201 = vld [vmem:[#allocation2 + $0x88] sm:$0xff]
        %v202 = vld [vmem:[#allocation2 + $0x90] sm:$0xff]
        %v203 = vld [vmem:[#allocation2 + $0x98] sm:$0xff]
        %v204 = vld [vmem:[#allocation2 + $0xa0] sm:$0xff]
        %v205 = vld [vmem:[#allocation2 + $0xa8] sm:$0xff]
        %v206 = vld [vmem:[#allocation2 + $0xb0] sm:$0xff]
        %v207 = vld [vmem:[#allocation2 + $0xb8] sm:$0xff]
        %v208 = vld [vmem:[#allocation2 + $0xc0] sm:$0xff]
        %v209 = vld [vmem:[#allocation2 + $0xc8] sm:$0xff]
        %v210 = vld [vmem:[#allocation2 + $0xd0] sm:$0xff]
        %v211 = vld [vmem:[#allocation2 + $0xd8] sm:$0xff]
        %v212 = vld [vmem:[#allocation2 + $0xe0] sm:$0xff]
        %v213 = vld [vmem:[#allocation2 + $0xe8] sm:$0xff]
        %v214 = vld [vmem:[#allocation2 + $0xf0] sm:$0xff]
        %v215 = vld [vmem:[#allocation2 + $0xf8] sm:$0xff]
        %v216 = vld [vmem:[%s127] sm:$0xff]
        %v217 = vld [vmem:[%s127 + $0x8] sm:$0xff]
        %v218 = vld [vmem:[%s127 + $0x10] sm:$0xff]
        %v219 = vld [vmem:[%s127 + $0x18] sm:$0xff]
        %v220 = vld [vmem:[%s127 + $0x20] sm:$0xff]
        %v221 = vld [vmem:[%s127 + $0x28] sm:$0xff]
        %v222 = vld [vmem:[%s127 + $0x30] sm:$0xff]
        %v223 = vld [vmem:[%s127 + $0x38] sm:$0xff]
        %v224 = vld [vmem:[%s127 + $0x40] sm:$0xff]
        %v225 = vld [vmem:[%s127 + $0x48] sm:$0xff]
        %v226 = vld [vmem:[%s127 + $0x50] sm:$0xff]
        %v227 = vld [vmem:[%s127 + $0x58] sm:$0xff]
        %v228 = vld [vmem:[%s127 + $0x60] sm:$0xff]
        %v229 = vld [vmem:[%s127 + $0x68] sm:$0xff]
        %v230 = vld [vmem:[%s127 + $0x70] sm:$0xff]
        %v231 = vld [vmem:[%s127 + $0x78] sm:$0xff]
        %v232 = vld [vmem:[%s127 + $0x80] sm:$0xff]
        %v233 = vld [vmem:[%s127 + $0x88] sm:$0xff]
        %v234 = vld [vmem:[%s127 + $0x90] sm:$0xff]
        %v235 = vld [vmem:[%s127 + $0x98] sm:$0xff]
        %v236 = vld [vmem:[%s127 + $0xa0] sm:$0xff]
        %v237 = vld [vmem:[%s127 + $0xa8] sm:$0xff]
        %v238 = vld [vmem:[%s127 + $0xb0] sm:$0xff]
        %v239 = vld [vmem:[%s127 + $0xb8] sm:$0xff]
        %v240 = vld [vmem:[%s127 + $0xc0] sm:$0xff]
        %v241 = vld [vmem:[%s127 + $0xc8] sm:$0xff]
        %v242 = vld [vmem:[%s127 + $0xd0] sm:$0xff]
        %v243 = vld [vmem:[%s127 + $0xd8] sm:$0xff]
        %v244 = vld [vmem:[%s127 + $0xe0] sm:$0xff]
        %v245 = vld [vmem:[%s127 + $0xe8] sm:$0xff]
        %v246 = vld [vmem:[%s127 + $0xf0] sm:$0xff]
        %v247 = vld [vmem:[%s127 + $0xf8] sm:$0xff]
        %v248 = vadd.f32 %v184, %v216
        %v249 = vadd.f32 %v185, %v217
        %v250 = vadd.f32 %v186, %v218
        %v251 = vadd.f32 %v187, %v219
        %v252 = vadd.f32 %v188, %v220
        %v253 = vadd.f32 %v189, %v221
        %v254 = vadd.f32 %v190, %v222
        %v255 = vadd.f32 %v191, %v223
        %v256 = vadd.f32 %v192, %v224
        %v257 = vadd.f32 %v193, %v225
        %v258 = vadd.f32 %v194, %v226
        %v259 = vadd.f32 %v195, %v227
        %v260 = vadd.f32 %v196, %v228
        %v261 = vadd.f32 %v197, %v229
        %v262 = vadd.f32 %v198, %v230
        %v263 = vadd.f32 %v199, %v231
        %v264 = vadd.f32 %v200, %v232
        %v265 = vadd.f32 %v201, %v233
        %v266 = vadd.f32 %v202, %v234
        %v267 = vadd.f32 %v203, %v235
        %v268 = vadd.f32 %v204, %v236
        %v269 = vadd.f32 %v205, %v237
        %v270 = vadd.f32 %v206, %v238
        %v271 = vadd.f32 %v207, %v239
        %v272 = vadd.f32 %v208, %v240
        %v273 = vadd.f32 %v209, %v241
        %v274 = vadd.f32 %v210, %v242
        %v275 = vadd.f32 %v211, %v243
        %v276 = vadd.f32 %v212, %v244
        %v277 = vadd.f32 %v213, %v245
        %v278 = vadd.f32 %v214, %v246
        %v279 = vadd.f32 %v215, %v247
        %280 = vst [vmem:[%s146] sm:$0xff] %v248
        %281 = vst [vmem:[%s146 + $0x8] sm:$0xff] %v249
        %282 = vst [vmem:[%s146 + $0x10] sm:$0xff] %v250
        %283 = vst [vmem:[%s146 + $0x18] sm:$0xff] %v251
        %284 = vst [vmem:[%s146 + $0x20] sm:$0xff] %v252
        %285 = vst [vmem:[%s146 + $0x28] sm:$0xff] %v253
        %286 = vst [vmem:[%s146 + $0x30] sm:$0xff] %v254
        %287 = vst [vmem:[%s146 + $0x38] sm:$0xff] %v255
        %288 = vst [vmem:[%s146 + $0x40] sm:$0xff] %v256
        %289 = vst [vmem:[%s146 + $0x48] sm:$0xff] %v257
        %290 = vst [vmem:[%s146 + $0x50] sm:$0xff] %v258
        %291 = vst [vmem:[%s146 + $0x58] sm:$0xff] %v259
        %292 = vst [vmem:[%s146 + $0x60] sm:$0xff] %v260
        %293 = vst [vmem:[%s146 + $0x68] sm:$0xff] %v261
        %294 = vst [vmem:[%s146 + $0x70] sm:$0xff] %v262
        %295 = vst [vmem:[%s146 + $0x78] sm:$0xff] %v263
        %296 = vst [vmem:[%s146 + $0x80] sm:$0xff] %v264
        %297 = vst [vmem:[%s146 + $0x88] sm:$0xff] %v265
        %298 = vst [vmem:[%s146 + $0x90] sm:$0xff] %v266
        %299 = vst [vmem:[%s146 + $0x98] sm:$0xff] %v267
        %300 = vst [vmem:[%s146 + $0xa0] sm:$0xff] %v268
        %301 = vst [vmem:[%s146 + $0xa8] sm:$0xff] %v269
        %302 = vst [vmem:[%s146 + $0xb0] sm:$0xff] %v270
        %303 = vst [vmem:[%s146 + $0xb8] sm:$0xff] %v271
        %304 = vst [vmem:[%s146 + $0xc0] sm:$0xff] %v272
        %305 = vst [vmem:[%s146 + $0xc8] sm:$0xff] %v273
        %306 = vst [vmem:[%s146 + $0xd0] sm:$0xff] %v274
        %307 = vst [vmem:[%s146 + $0xd8] sm:$0xff] %v275
        %308 = vst [vmem:[%s146 + $0xe0] sm:$0xff] %v276
        %309 = vst [vmem:[%s146 + $0xe8] sm:$0xff] %v277
        %310 = vst [vmem:[%s146 + $0xf0] sm:$0xff] %v278
        %311 = vst [vmem:[%s146 + $0xf8] sm:$0xff] %v279
        %s312 = sand.u32 %s62, 1
        %s313 = scalar_lea.sflag [#allocation8], %s312
        %s314 = sand.u32 %s62, 1
        %s315 = smul.addr %s314, 256
        %s316 = scalar_lea.vmem [#allocation9], %s315
        // Predicated region
        $region47: #{tpu_custom_call.1} parent=23 // pred_check
          %p317 = pneg %p72
        $region48: #{tpu_custom_call.1} parent=23 // pred_check_branch
          %319 = sbr.rel (%p317) target = $region50
        $region49: #{tpu_custom_call.1} parent=23 // pred_region
          %s320 = smul.u32 32, %s28
          %322 = vsyncadd %s313, 0
          %s323 = smul.addr %s320, 8
          %s324 = scalar_lea.hbm %s3, %s323
          %s325 = sshll.u32 %s316, 4
          %s326 = int_to_ptr.vmem [resolvable:$true] %s325
          %s327 = sshll.u32 %s324, 4
          %s328 = int_to_ptr.hbm [resolvable:$true] %s327
          %333 = dma.vmem_to_hbm [thread:$0]  %s326, 4096, %s328, %s313, 128, 128, 8
        $region50: #{tpu_custom_call.1} parent=23 // pred_fallthru
          _
      $region24: #{tpu_custom_call.1} parent=5 // pred_fallthru
        _
      %p334 = scmp.le.s32.totalorder 2, %s23
      // Predicated region
      $region51: #{tpu_custom_call.1} parent=5 // pred_check
        %p335 = pneg %p334
      $region52: #{tpu_custom_call.1} parent=5 // pred_check_branch
        %337 = sbr.rel (%p335) target = $region54
      $region53: #{tpu_custom_call.1} parent=5 // pred_region
        %s338 = ssub.s32 %s23, 2
        // Predicated region
        $region55: #{tpu_custom_call.1} parent=53 // pred_check
          %p339 = pneg %p78
        $region56: #{tpu_custom_call.1} parent=53 // pred_check_branch
          %341 = sbr.rel (%p339) target = $region58
        $region57: #{tpu_custom_call.1} parent=53 // pred_region
          %s342 = sand.u32 %s63, 1
          %s343 = scalar_lea.sflag [#allocation8], %s342
          %s344 = sand.u32 %s63, 1
          %s345 = smul.addr %s344, 256
          %s346 = scalar_lea.vmem [#allocation9], %s345
          %348 = dma.done %s343, 4096
        $region58: #{tpu_custom_call.1} parent=53 // pred_fallthru
          _
      $region54: #{tpu_custom_call.1} parent=5 // pred_fallthru
        _
    $region6: #{tpu_custom_call.1} parent=1 // loop_footer
      %s27 = sadd.s32 1, %s23
    $region7: #{tpu_custom_call.1} parent=1 // loop_footer_branch
      %22 = sbr.rel target = $region3
    $region8: #{tpu_custom_call.1} parent=1 // loop_exit
      _
    %349 = vsyncpa [#allocation7], 1
    %s350 = scalar_lea.sflag [#allocation7], 1
    %351 = vsyncpa %s350, 1
    %352 = vsyncpa [#allocation8], 1
    %s353 = scalar_lea.sflag [#allocation8], 1
    %354 = vsyncpa %s353, 1
  %355 = vsyncmov [#allocation3]
  %s356 = vpop.sfrf %355
  %p357 = scmp.eq.s32.totalorder %s356, 0
  %p358 = pneg %p357
  %360 = shalt.err (%p358)

</llo_original>
